<compile_context>
chip_gen: v7x
topology: tpu7x:2x2x1
jax: 0.10.0
libtpu: 0.0.40
codegen_flags: <defaults>
</compile_context>

<pallas_src>
import math

import jax
import jax.numpy as jnp
from jax.experimental import pallas as pl
from jax.experimental.pallas import tpu as pltpu

_VMEM_LIMIT_BYTES = 48 * 1024 * 1024  # < v7x 64 MiB physical, > v5e 16 MiB scoped default
_NEG_INF = -1000000.0                 # matches d2l.sequence_mask(value=-1e6)


def _make_attn_kernel(return_weights):
    def _attn_kernel(q_ref, k_ref, v_ref, vl_ref, o_ref, *maybe_w_ref):
        # q_ref: (bb, tq, d), k_ref: (bb, K, d), v_ref: (bb, K, Dv), vl_ref: (bb, 1, 1) int32
        d = q_ref.shape[-1]
        scale = jnp.asarray(1.0 / math.sqrt(d), q_ref.dtype)

        # Fold 1/sqrt(d) into Q (bb*tq*d elems) instead of scaling the (bb, tq, K) scores.
        # Keep the input dtype so bf16 inputs stay on the fast MXU path (f32 accumulation below).
        q = q_ref[...] * scale
        k = k_ref[...]
        v = v_ref[...]

        # Batched Q @ K^T contracting over d -- no transposed copy of K in VMEM.
        scores = jnp.einsum("bqd,bkd->bqk", q, k, preferred_element_type=jnp.float32)

        # sequence_mask: key positions >= valid_len get -1e6.
        vl = vl_ref[...]  # (bb, 1, 1) int32, broadcasts against (bb, tq, K)
        key_idx = jax.lax.broadcasted_iota(jnp.int32, scores.shape, dimension=2)
        scores = jnp.where(key_idx < vl, scores, jnp.float32(_NEG_INF))
        # TODO(synk): for long sequences, tile K with online softmax and scalar-prefetched
        # valid_lens (PrefetchScalarGridSpec) to skip fully-masked K tiles; toy shapes fit in
        # one tile so the mask alone is correct here.

        # Numerically stable softmax over keys in f32.
        m = jnp.max(scores, axis=-1, keepdims=True)
        e = jnp.exp(scores - m)
        denom = jnp.sum(e, axis=-1, keepdims=True)
        # approx reciprocal on the (otherwise idle) EUP + one Newton-Raphson step for accuracy.
        r = pl.reciprocal(denom, approx=True)
        r = r * (jnp.float32(2.0) - denom * r)
        w = e * r

        # TODO(synk): dropout treated as identity (eval-mode forward); training dropout is stochastic.

        if return_weights:
            maybe_w_ref[0][...] = w.astype(maybe_w_ref[0].dtype)
        o_ref[...] = jnp.einsum(
            "bqk,bkv->bqv", w.astype(v.dtype), v, preferred_element_type=jnp.float32
        ).astype(o_ref.dtype)

    return _attn_kernel


def _pick_batch_tile(B, per_batch_bytes, budget_bytes):
    """Largest divisor of B whose double-buffered working set fits the budget.

    Among fitting tiles, prefer one that yields an even number of grid steps (keeps both
    v7x TensorCores busy) as long as it is at most 2x smaller than the largest fitting tile.
    """
    fitting = [bb for bb in range(1, B + 1)
               if B % bb == 0 and 2 * bb * per_batch_bytes <= budget_bytes]
    if not fitting:
        return 1  # smallest legal tile minimizes VMEM pressure
    best = max(fitting)
    even_nb = [bb for bb in fitting if (B // bb) % 2 == 0]
    if even_nb and max(even_nb) * 2 >= best:
        return max(even_nb)
    return best


def dot_product_attention(queries, keys, values, valid_lens, dropout=0.0,
                          return_weights=True):
    """Pallas implementation of DotProductAttention.forward (eval mode)."""
    B, Q, d = queries.shape
    _, K, _ = keys.shape
    Dv = values.shape[-1]
    out_dtype = queries.dtype

    itemsize = jnp.dtype(queries.dtype).itemsize
    out_itemsize = jnp.dtype(out_dtype).itemsize
    per_batch_bytes = (
        (Q * d + K * d + K * Dv) * itemsize          # inputs
        + Q * Dv * out_itemsize                      # output
        + (Q * K * out_itemsize if return_weights else 0)  # weights output
        + 2 * Q * K * 4                              # f32 scores / exp intermediates
        + 4                                          # valid_lens
    )
    bb = _pick_batch_tile(B, per_batch_bytes, _VMEM_LIMIT_BYTES // 2)
    nb = B // bb

    # If only a single batch step remains, split Q so v7x's two TensorCores both get work.
    tq, nq = Q, 1
    if nb < 2 and Q >= 16 and Q % 16 == 0:
        tq, nq = Q // 2, 2

    vl3d = valid_lens.astype(jnp.int32).reshape(B, 1, 1)

    in_specs = [
        pl.BlockSpec((bb, tq, d), lambda b, qi: (b, qi, 0)),
        pl.BlockSpec((bb, K, d), lambda b, qi: (b, 0, 0)),
        pl.BlockSpec((bb, K, Dv), lambda b, qi: (b, 0, 0)),
        pl.BlockSpec((bb, 1, 1), lambda b, qi: (b, 0, 0)),
    ]
    out_spec_o = pl.BlockSpec((bb, tq, Dv), lambda b, qi: (b, qi, 0))
    if return_weights:
        out_shape = (
            jax.ShapeDtypeStruct((B, Q, Dv), out_dtype),
            jax.ShapeDtypeStruct((B, Q, K), out_dtype),
        )
        out_specs = [out_spec_o, pl.BlockSpec((bb, tq, K), lambda b, qi: (b, qi, 0))]
    else:
        out_shape = jax.ShapeDtypeStruct((B, Q, Dv), out_dtype)
        out_specs = out_spec_o

    grid_spec = pltpu.PrefetchScalarGridSpec(
        num_scalar_prefetch=0,
        grid=(nb, nq),
        in_specs=in_specs,
        out_specs=out_specs,
    )

    result = pl.pallas_call(
        _make_attn_kernel(return_weights),
        out_shape=out_shape,
        grid_spec=grid_spec,
        compiler_params=pltpu.CompilerParams(
            dimension_semantics=("parallel", "parallel"),
            vmem_limit_bytes=_VMEM_LIMIT_BYTES,
        ),
    )(queries, keys, values, vl3d)

    if return_weights:
        out, weights = result
        return out, weights
    return result


def _reference(queries, keys, values, valid_lens):
    d = queries.shape[-1]
    scores = jnp.einsum("bqd,bkd->bqk", queries, keys) / math.sqrt(d)
    key_idx = jnp.arange(scores.shape[-1])[None, None, :]
    mask = key_idx < valid_lens[:, None, None]
    scores = jnp.where(mask, scores, _NEG_INF)
    w = jax.nn.softmax(scores, axis=-1)
    return jnp.einsum("bqk,bkv->bqv", w, values), w


if __name__ == "__main__":
    # Shapes mirror the d2l example the module is used with:
    # queries (2, 1, 2), keys (2, 10, 2), values (2, 10, 4), valid_lens = [2, 6]
    key = jax.random.PRNGKey(0)
    kq, kk = jax.random.split(key)

    B, Q, K, d, Dv = 2, 1, 10, 2, 4
    queries = jax.random.normal(kq, (B, Q, d), dtype=jnp.float32)
    keys = jax.random.normal(kk, (B, K, d), dtype=jnp.float32)
    # torch spec: values = arange(40).reshape(1, 10, 4).repeat(2, 1, 1)
    values = jnp.tile(
        jnp.arange(K * Dv, dtype=jnp.float32).reshape(1, K, Dv), (B, 1, 1)
    )
    valid_lens = jnp.array([2, 6], dtype=jnp.int32)

    out, weights = dot_product_attention(queries, keys, values, valid_lens, dropout=0.0)
    out = jax.block_until_ready(out)
    weights = jax.block_until_ready(weights)

    ref_out, ref_w = _reference(queries, keys, values, valid_lens)
    assert jnp.allclose(out, ref_out, rtol=1e-5, atol=1e-5), "output mismatch"
    assert jnp.allclose(weights, ref_w, rtol=1e-5, atol=1e-5), "weights mismatch"

    # Also exercise the no-weights fast path (skips the O(B*Q*K) HBM writeback).
    out_only = jax.block_until_ready(
        dot_product_attention(queries, keys, values, valid_lens, return_weights=False)
    )
    assert jnp.allclose(out_only, ref_out, rtol=1e-5, atol=1e-5), "output-only mismatch"

    print("KERNEL_OK")
</pallas_src>

<mosaic_0001>
module attributes {stable_mosaic.version = 11 : i64} {
  func.func @_attn_kernel(%arg0: i32, %arg1: i32, %arg2: memref<1x1x2xf32, #tpu.memory_space<vmem>>, %arg3: memref<1x10x2xf32, #tpu.memory_space<vmem>>, %arg4: memref<1x10x4xf32, #tpu.memory_space<vmem>>, %arg5: memref<1x1x1xi32, #tpu.memory_space<vmem>>, %arg6: memref<1x1x4xf32, #tpu.memory_space<vmem>>, %arg7: memref<1x1x10xf32, #tpu.memory_space<vmem>>) attributes {dimension_semantics = [#tpu.dimension_semantics<parallel>, #tpu.dimension_semantics<parallel>], iteration_bounds = array<i64: 2, 1>, scalar_prefetch = 0 : i64, scratch_operands = 0 : i64, tpu.core_type = #tpu.core_type<tc>, window_params = [{transform_indices = @transform_0, window_bounds = array<i64: 1, 1, 2>}, {transform_indices = @transform_1, window_bounds = array<i64: 1, 10, 2>}, {transform_indices = @transform_2, window_bounds = array<i64: 1, 10, 4>}, {transform_indices = @transform_3, window_bounds = array<i64: 1, 1, 1>}, {transform_indices = @transform_4, window_bounds = array<i64: 1, 1, 4>}, {transform_indices = @transform_5, window_bounds = array<i64: 1, 1, 10>}]} {
    %c0 = arith.constant 0 : index
    %c0_0 = arith.constant 0 : index
    %c0_1 = arith.constant 0 : index
    %0 = vector.load %arg2[%c0, %c0_0, %c0_1] : memref<1x1x2xf32, #tpu.memory_space<vmem>>, vector<1x1x2xf32>
    %cst = arith.constant 0.707106769 : f32
    %1 = vector.broadcast %cst : f32 to vector<1x1x2xf32>
    %2 = arith.mulf %0, %1 : vector<1x1x2xf32>
    %c0_2 = arith.constant 0 : index
    %c0_3 = arith.constant 0 : index
    %c0_4 = arith.constant 0 : index
    %3 = vector.load %arg3[%c0_2, %c0_3, %c0_4] : memref<1x10x2xf32, #tpu.memory_space<vmem>>, vector<1x10x2xf32>
    %c0_5 = arith.constant 0 : index
    %c0_6 = arith.constant 0 : index
    %c0_7 = arith.constant 0 : index
    %4 = vector.load %arg4[%c0_5, %c0_6, %c0_7] : memref<1x10x4xf32, #tpu.memory_space<vmem>>, vector<1x10x4xf32>
    "tpu.trace_start"() <{level = 10 : i32, message = "bqd,bkd->bqk"}> : () -> ()
    %cst_8 = arith.constant dense<0.000000e+00> : vector<1x1x10xf32>
    %5 = tpu.matmul %2, %3, %cst_8 {dimension_numbers = #tpu.dot_dimension_numbers<[2], [2], [1], [1], [0, 0, 0, 1, 1, 1], [0], [0]>} : vector<1x1x2xf32>, vector<1x10x2xf32>, vector<1x1x10xf32> -> vector<1x1x10xf32>
    "tpu.trace_stop"() : () -> ()
    %c0_9 = arith.constant 0 : index
    %c0_10 = arith.constant 0 : index
    %c0_11 = arith.constant 0 : index
    %6 = vector.load %arg5[%c0_9, %c0_10, %c0_11] : memref<1x1x1xi32, #tpu.memory_space<vmem>>, vector<1x1x1xi32>
    %7 = tpu.iota {dimensions = array<i32: 2>} : vector<1x1x10xi32>
    %8 = vector.broadcast %6 : vector<1x1x1xi32> to vector<1x1x10xi32>
    %9 = arith.cmpi slt, %7, %8 : vector<1x1x10xi32>
    %cst_12 = arith.constant -1.000000e+06 : f32
    %10 = vector.broadcast %cst_12 : f32 to vector<1x1x10xf32>
    %11 = arith.select %9, %5, %10 : vector<1x1x10xi1>, vector<1x1x10xf32>
    %cst_13 = arith.constant dense<0xFF800000> : vector<1x1xf32>
    %12 = vector.multi_reduction <maximumf>, %11, %cst_13 [2] : vector<1x1x10xf32> to vector<1x1xf32>
    %13 = vector.shape_cast %12 : vector<1x1xf32> to vector<1x1x1xf32>
    %14 = vector.broadcast %13 : vector<1x1x1xf32> to vector<1x1x10xf32>
    %15 = arith.subf %11, %14 : vector<1x1x10xf32>
    %16 = math.exp %15 : vector<1x1x10xf32>
    %cst_14 = arith.constant dense<0.000000e+00> : vector<1x1xf32>
    %17 = vector.multi_reduction <add>, %16, %cst_14 [2] : vector<1x1x10xf32> to vector<1x1xf32>
    %18 = vector.shape_cast %17 : vector<1x1xf32> to vector<1x1x1xf32>
    %19 = tpu.reciprocal %18 {approx = true} : vector<1x1x1xf32> -> vector<1x1x1xf32>
    %20 = arith.mulf %18, %19 : vector<1x1x1xf32>
    %cst_15 = arith.constant 2.000000e+00 : f32
    %21 = vector.broadcast %cst_15 : f32 to vector<1x1x1xf32>
    %22 = arith.subf %21, %20 : vector<1x1x1xf32>
    %23 = arith.mulf %19, %22 : vector<1x1x1xf32>
    %24 = vector.broadcast %23 : vector<1x1x1xf32> to vector<1x1x10xf32>
    %25 = arith.mulf %16, %24 : vector<1x1x10xf32>
    %c0_16 = arith.constant 0 : index
    %c0_17 = arith.constant 0 : index
    %c0_18 = arith.constant 0 : index
    %26 = vector.load %arg7[%c0_16, %c0_17, %c0_18] : memref<1x1x10xf32, #tpu.memory_space<vmem>>, vector<1x1x10xf32>
    tpu.vector_store %arg7[%c0_16, %c0_17, %c0_18], %25 {strides = array<i32>} : memref<1x1x10xf32, #tpu.memory_space<vmem>>, vector<1x1x10xf32>,
    "tpu.trace_start"() <{level = 10 : i32, message = "bqk,bkv->bqv"}> : () -> ()
    %cst_19 = arith.constant dense<0.000000e+00> : vector<1x1x4xf32>
    %27 = tpu.matmul %25, %4, %cst_19 {dimension_numbers = #tpu.dot_dimension_numbers<[2], [1], [1], [2], [0, 0, 0, 1, 1, 2], [0], [0]>} : vector<1x1x10xf32>, vector<1x10x4xf32>, vector<1x1x4xf32> -> vector<1x1x4xf32>
    "tpu.trace_stop"() : () -> ()
    %c0_20 = arith.constant 0 : index
    %c0_21 = arith.constant 0 : index
    %c0_22 = arith.constant 0 : index
    %28 = vector.load %arg6[%c0_20, %c0_21, %c0_22] : memref<1x1x4xf32, #tpu.memory_space<vmem>>, vector<1x1x4xf32>
    tpu.vector_store %arg6[%c0_20, %c0_21, %c0_22], %27 {strides = array<i32>} : memref<1x1x4xf32, #tpu.memory_space<vmem>>, vector<1x1x4xf32>,
    return
  }
  func.func @transform_0(%arg0: i32, %arg1: i32) -> (i32, i32, i32) {
    %c0_i32 = arith.constant 0 : i32
    %c0_i32_0 = arith.constant 0 : i32
    return %arg0, %arg1, %c0_i32 : i32, i32, i32
  }
  func.func @transform_1(%arg0: i32, %arg1: i32) -> (i32, i32, i32) {
    %c0_i32 = arith.constant 0 : i32
    %c0_i32_0 = arith.constant 0 : i32
    %c0_i32_1 = arith.constant 0 : i32
    return %arg0, %c0_i32, %c0_i32_0 : i32, i32, i32
  }
  func.func @transform_2(%arg0: i32, %arg1: i32) -> (i32, i32, i32) {
    %c0_i32 = arith.constant 0 : i32
    %c0_i32_0 = arith.constant 0 : i32
    %c0_i32_1 = arith.constant 0 : i32
    return %arg0, %c0_i32, %c0_i32_0 : i32, i32, i32
  }
  func.func @transform_3(%arg0: i32, %arg1: i32) -> (i32, i32, i32) {
    %c0_i32 = arith.constant 0 : i32
    %c0_i32_0 = arith.constant 0 : i32
    %c0_i32_1 = arith.constant 0 : i32
    return %arg0, %c0_i32, %c0_i32_0 : i32, i32, i32
  }
  func.func @transform_4(%arg0: i32, %arg1: i32) -> (i32, i32, i32) {
    %c0_i32 = arith.constant 0 : i32
    %c0_i32_0 = arith.constant 0 : i32
    return %arg0, %arg1, %c0_i32 : i32, i32, i32
  }
  func.func @transform_5(%arg0: i32, %arg1: i32) -> (i32, i32, i32) {
    %c0_i32 = arith.constant 0 : i32
    %c0_i32_0 = arith.constant 0 : i32
    return %arg0, %arg1, %c0_i32 : i32, i32, i32
  }
}

</mosaic_0001>

<llo_original>
// kernel: tpu_custom_call.1
$region0: #{tpu_custom_call.1}
  #allocation0 [shape = 'u32[]', space=smem, size = 0x4, offset = 0x4, fixed_abs, tag = 'smem constant byte address 0x4 - core index']
  #allocation1 [shape = 'u32[144,128]{1,0:T(1,128)}', space=vmem, size = 0x12000, scoped, tag = 'internal scratch']
  %s0 = inlined_call_operand.vmem [shape: f32[2,1,2], index: 0, kind: input, shape index: {}]
  %s1 = inlined_call_operand.vmem [shape: f32[2,10,2], index: 1, kind: input, shape index: {}]
  %s2 = inlined_call_operand.vmem [shape: f32[2,10,4], index: 2, kind: input, shape index: {}]
  %s3 = inlined_call_operand.vmem [shape: s32[2,1,1], index: 3, kind: input, shape index: {}]
  %s4 = inlined_call_operand.hbm [shape: f32[2,1,4], index: 4, kind: output, shape index: {0}]
  %s5 = inlined_call_operand.hbm [shape: f32[2,1,10], index: 5, kind: output, shape index: {1}]
  %6 = xla_tuple %s4, %s5
  %s7 = sld [smem:[#allocation0]]
  $region57: #{tpu_custom_call.1} parent=0
    _
  %s9 = ssub.s32 1, %s7
  %s10 = scalar_select 0, %s9, %s7
  $region1: #{tpu_custom_call.1} parent=0
    #allocation2 [shape = 'u8[1024]{0}', space=vmem, size = 0x400, scoped, tag = 'output window, operand 0']
    #allocation3 [shape = 's32[2]{0}', space=sflag, size = 0x8, scoped, tag = 'scoped memory for tpu_custom_call.1']
    #allocation4 [shape = 'u8[1024]{0}', space=vmem, size = 0x400, scoped, tag = 'output window, operand 1']
    #allocation5 [shape = 's32[2]{0}', space=sflag, size = 0x8, scoped, tag = 'scoped memory for tpu_custom_call.1']
    %11 = vsyncpa [#allocation3], 0
    %s12 = scalar_lea.sflag [#allocation3], 1
    %13 = vsyncpa %s12, 0
    %14 = vsyncpa [#allocation5], 0
    %s15 = scalar_lea.sflag [#allocation5], 1
    %16 = vsyncpa %s15, 0
    loop: start=0, step=1, limit=4
    $region2: #{tpu_custom_call.1} parent=1 // loop_pre_header
      _
    $region3: #{tpu_custom_call.1} parent=1 // loop_header
      %s18 = sphi 0, %s22
      %p19 = scmp.ge.s32.totalorder %s18, 4
      %s25 = sphi 0, %s37
      %s26 = sphi 0, %s33
      %s27 = sphi 0, %s25
      %s28 = sphi 0, %s26
      %s29 = sphi 0, %s27
      %s30 = sphi 0, %s28
      %s42 = sphi 0, %s44
      %s45 = sphi 0, %s42
      %s46 = sphi 0, %s45
      %s62 = sphi 0, %s46
      %s68 = sphi 0, %s70
      %s71 = sphi 0, %s68
      %s72 = sphi 0, %s71
      %s88 = sphi 0, %s72
      %s94 = sphi 0, %s96
      %s97 = sphi 0, %s94
      %s98 = sphi 0, %s97
      %s114 = sphi 0, %s98
      %s120 = sphi 0, %s122
      %s123 = sphi 0, %s120
      %s124 = sphi 0, %s123
      %s140 = sphi 0, %s124
      %s148 = sphi 0, %s150
      %s151 = sphi 0, %s148
      %s152 = sphi 0, %s151
      %s168 = sphi 0, %s152
      %s176 = sphi 0, %s178
      %s179 = sphi 0, %s176
      %s180 = sphi 0, %s179
      %s196 = sphi 0, %s180
    $region4: #{tpu_custom_call.1} parent=1 // loop_header_branch
      %21 = sbr.rel (%p19) target = $region8
    $region5: #{tpu_custom_call.1} parent=1 // loop_body
      %s23 = ssub.s32 %s18, 1
      %s24 = ssub.s32 %s18, 2
      %s31 = sadd.s32 1, %s26
      %p32 = scmp.ge.s32.totalorder %s31, 1
      %s33 = scalar_select %p32, 0, %s31
      %s34 = sadd.s32 1, %s25
      %s35 = scalar_select %p32, %s34, %s25
      %p36 = scmp.ge.s32.totalorder %s35, 2
      %s37 = scalar_select %p36, 0, %s35
      %s38 = ssub.s32 %s25, %s37
      %s39 = ssub.s32 %s26, %s33
      %s40 = sor.u32 %s38, %s39
      %p41 = scmp.eq.s32.totalorder %s40, 0
      %s43 = sadd.s32 %s42, 1
      %s44 = scalar_select %p41, %s42, %s43
      %p47 = pneg %p41
      %p48 = scmp.eq.s32.totalorder %s18, 1
      %p49 = por %p47, %p48
      %p50 = scmp.ne.s32.totalorder %s42, %s45
      %p51 = scmp.eq.s32.totalorder %s18, 0
      %p52 = por %p50, %p51
      %p53 = scmp.ne.s32.totalorder %s42, %s45
      %p54 = scmp.eq.s32.totalorder %s23, 1
      %p55 = por %p53, %p54
      %p56 = scmp.ne.s32.totalorder %s45, %s46
      %p57 = scmp.eq.s32.totalorder %s23, 0
      %p58 = por %p56, %p57
      %p59 = scmp.ne.s32.totalorder %s45, %s46
      %p60 = scmp.eq.s32.totalorder %s24, 1
      %p61 = por %p59, %p60
      %p63 = scmp.ne.s32.totalorder %s46, %s62
      %p64 = scmp.eq.s32.totalorder %s24, 0
      %p65 = por %p63, %p64
      %s66 = ssub.s32 %s25, %s37
      %p67 = scmp.eq.s32.totalorder %s66, 0
      %s69 = sadd.s32 %s68, 1
      %s70 = scalar_select %p67, %s68, %s69
      %p73 = pneg %p67
      %p74 = scmp.eq.s32.totalorder %s18, 1
      %p75 = por %p73, %p74
      %p76 = scmp.ne.s32.totalorder %s68, %s71
      %p77 = scmp.eq.s32.totalorder %s18, 0
      %p78 = por %p76, %p77
      %p79 = scmp.ne.s32.totalorder %s68, %s71
      %p80 = scmp.eq.s32.totalorder %s23, 1
      %p81 = por %p79, %p80
      %p82 = scmp.ne.s32.totalorder %s71, %s72
      %p83 = scmp.eq.s32.totalorder %s23, 0
      %p84 = por %p82, %p83
      %p85 = scmp.ne.s32.totalorder %s71, %s72
      %p86 = scmp.eq.s32.totalorder %s24, 1
      %p87 = por %p85, %p86
      %p89 = scmp.ne.s32.totalorder %s72, %s88
      %p90 = scmp.eq.s32.totalorder %s24, 0
      %p91 = por %p89, %p90
      %s92 = ssub.s32 %s25, %s37
      %p93 = scmp.eq.s32.totalorder %s92, 0
      %s95 = sadd.s32 %s94, 1
      %s96 = scalar_select %p93, %s94, %s95
      %p99 = pneg %p93
      %p100 = scmp.eq.s32.totalorder %s18, 1
      %p101 = por %p99, %p100
      %p102 = scmp.ne.s32.totalorder %s94, %s97
      %p103 = scmp.eq.s32.totalorder %s18, 0
      %p104 = por %p102, %p103
      %p105 = scmp.ne.s32.totalorder %s94, %s97
      %p106 = scmp.eq.s32.totalorder %s23, 1
      %p107 = por %p105, %p106
      %p108 = scmp.ne.s32.totalorder %s97, %s98
      %p109 = scmp.eq.s32.totalorder %s23, 0
      %p110 = por %p108, %p109
      %p111 = scmp.ne.s32.totalorder %s97, %s98
      %p112 = scmp.eq.s32.totalorder %s24, 1
      %p113 = por %p111, %p112
      %p115 = scmp.ne.s32.totalorder %s98, %s114
      %p116 = scmp.eq.s32.totalorder %s24, 0
      %p117 = por %p115, %p116
      %s118 = ssub.s32 %s25, %s37
      %p119 = scmp.eq.s32.totalorder %s118, 0
      %s121 = sadd.s32 %s120, 1
      %s122 = scalar_select %p119, %s120, %s121
      %p125 = pneg %p119
      %p126 = scmp.eq.s32.totalorder %s18, 1
      %p127 = por %p125, %p126
      %p128 = scmp.ne.s32.totalorder %s120, %s123
      %p129 = scmp.eq.s32.totalorder %s18, 0
      %p130 = por %p128, %p129
      %p131 = scmp.ne.s32.totalorder %s120, %s123
      %p132 = scmp.eq.s32.totalorder %s23, 1
      %p133 = por %p131, %p132
      %p134 = scmp.ne.s32.totalorder %s123, %s124
      %p135 = scmp.eq.s32.totalorder %s23, 0
      %p136 = por %p134, %p135
      %p137 = scmp.ne.s32.totalorder %s123, %s124
      %p138 = scmp.eq.s32.totalorder %s24, 1
      %p139 = por %p137, %p138
      %p141 = scmp.ne.s32.totalorder %s124, %s140
      %p142 = scmp.eq.s32.totalorder %s24, 0
      %p143 = por %p141, %p142
      %s144 = ssub.s32 %s25, %s37
      %s145 = ssub.s32 %s26, %s33
      %s146 = sor.u32 %s144, %s145
      %p147 = scmp.eq.s32.totalorder %s146, 0
      %s149 = sadd.s32 %s148, 1
      %s150 = scalar_select %p147, %s148, %s149
      %p153 = pneg %p147
      %p154 = scmp.eq.s32.totalorder %s18, 1
      %p155 = por %p153, %p154
      %p156 = scmp.ne.s32.totalorder %s148, %s151
      %p157 = scmp.eq.s32.totalorder %s18, 0
      %p158 = por %p156, %p157
      %p159 = scmp.ne.s32.totalorder %s148, %s151
      %p160 = scmp.eq.s32.totalorder %s23, 1
      %p161 = por %p159, %p160
      %p162 = scmp.ne.s32.totalorder %s151, %s152
      %p163 = scmp.eq.s32.totalorder %s23, 0
      %p164 = por %p162, %p163
      %p165 = scmp.ne.s32.totalorder %s151, %s152
      %p166 = scmp.eq.s32.totalorder %s24, 1
      %p167 = por %p165, %p166
      %p169 = scmp.ne.s32.totalorder %s152, %s168
      %p170 = scmp.eq.s32.totalorder %s24, 0
      %p171 = por %p169, %p170
      %s172 = ssub.s32 %s25, %s37
      %s173 = ssub.s32 %s26, %s33
      %s174 = sor.u32 %s172, %s173
      %p175 = scmp.eq.s32.totalorder %s174, 0
      %s177 = sadd.s32 %s176, 1
      %s178 = scalar_select %p175, %s176, %s177
      %p181 = pneg %p175
      %p182 = scmp.eq.s32.totalorder %s18, 1
      %p183 = por %p181, %p182
      %p184 = scmp.ne.s32.totalorder %s176, %s179
      %p185 = scmp.eq.s32.totalorder %s18, 0
      %p186 = por %p184, %p185
      %p187 = scmp.ne.s32.totalorder %s176, %s179
      %p188 = scmp.eq.s32.totalorder %s23, 1
      %p189 = por %p187, %p188
      %p190 = scmp.ne.s32.totalorder %s179, %s180
      %p191 = scmp.eq.s32.totalorder %s23, 0
      %p192 = por %p190, %p191
      %p193 = scmp.ne.s32.totalorder %s179, %s180
      %p194 = scmp.eq.s32.totalorder %s24, 1
      %p195 = por %p193, %p194
      %p197 = scmp.ne.s32.totalorder %s180, %s196
      %p198 = scmp.eq.s32.totalorder %s24, 0
      %p199 = por %p197, %p198
      %p200 = scmp.le.s32.totalorder 1, %s18
      %p201 = scmp.lt.s32.totalorder %s18, 3
      %p202 = pnand %p200, %p201
      %p203 = pneg %p202
      // Predicated region
      $region9: #{tpu_custom_call.1} parent=5 // pred_check
        _
      $region10: #{tpu_custom_call.1} parent=5 // pred_check_branch
        %205 = sbr.rel (%p202) target = $region12
      $region11: #{tpu_custom_call.1} parent=5 // pred_region
        %s206 = ssub.s32 %s18, 1
      $region12: #{tpu_custom_call.1} parent=5 // pred_fallthru
        _
      %p207 = scmp.lt.s32.totalorder %s18, 2
      // Predicated region
      $region13: #{tpu_custom_call.1} parent=5 // pred_check
        %p208 = pneg %p207
      $region14: #{tpu_custom_call.1} parent=5 // pred_check_branch
        %210 = sbr.rel (%p208) target = $region16
      $region15: #{tpu_custom_call.1} parent=5 // pred_region
        // Predicated region
        $region17: #{tpu_custom_call.1} parent=15 // pred_check
          %p211 = pneg %p52
        $region18: #{tpu_custom_call.1} parent=15 // pred_check_branch
          %213 = sbr.rel (%p211) target = $region20
        $region19: #{tpu_custom_call.1} parent=15 // pred_region
          %p214 = scmp.lt.s32.totalorder %s25, 1
          %s215 = scalar_select %p214, %s25, 1
          %p216 = scmp.lt.s32.totalorder %s26, 0
          %s217 = scalar_select %p216, %s26, 0
          %s218 = sadd.s32 %s217, %s215
          %s219 = scalar_lea.vmem %s0, %s218
        $region20: #{tpu_custom_call.1} parent=15 // pred_fallthru
          _
        // Predicated region
        $region21: #{tpu_custom_call.1} parent=15 // pred_check
          %p220 = pneg %p78
        $region22: #{tpu_custom_call.1} parent=15 // pred_check_branch
          %222 = sbr.rel (%p220) target = $region24
        $region23: #{tpu_custom_call.1} parent=15 // pred_region
          %p223 = scmp.lt.s32.totalorder %s25, 1
          %s224 = scalar_select %p223, %s25, 1
          %s225 = smul.addr %s224, 2
          %s226 = smul.addr %s225, 8
          %s227 = scalar_lea.vmem %s1, %s226
        $region24: #{tpu_custom_call.1} parent=15 // pred_fallthru
          _
        // Predicated region
        $region25: #{tpu_custom_call.1} parent=15 // pred_check
          %p228 = pneg %p104
        $region26: #{tpu_custom_call.1} parent=15 // pred_check_branch
          %230 = sbr.rel (%p228) target = $region28
        $region27: #{tpu_custom_call.1} parent=15 // pred_region
          %p231 = scmp.lt.s32.totalorder %s25, 1
          %s232 = scalar_select %p231, %s25, 1
          %s233 = smul.addr %s232, 2
          %s234 = smul.addr %s233, 8
          %s235 = scalar_lea.vmem %s2, %s234
        $region28: #{tpu_custom_call.1} parent=15 // pred_fallthru
          _
        // Predicated region
        $region29: #{tpu_custom_call.1} parent=15 // pred_check
          %p236 = pneg %p130
        $region30: #{tpu_custom_call.1} parent=15 // pred_check_branch
          %238 = sbr.rel (%p236) target = $region32
        $region31: #{tpu_custom_call.1} parent=15 // pred_region
          %p239 = scmp.lt.s32.totalorder %s25, 1
          %s240 = scalar_select %p239, %s25, 1
          %s241 = scalar_lea.vmem %s3, %s240
        $region32: #{tpu_custom_call.1} parent=15 // pred_fallthru
          _
      $region16: #{tpu_custom_call.1} parent=5 // pred_fallthru
        _
      %p242 = scmp.le.s32.totalorder 1, %s18
      %p243 = scmp.lt.s32.totalorder %s18, 3
      %p244 = pnand %p242, %p243
      %p245 = pneg %p244
      // Predicated region
      $region33: #{tpu_custom_call.1} parent=5 // pred_check
        _
      $region34: #{tpu_custom_call.1} parent=5 // pred_check_branch
        %247 = sbr.rel (%p244) target = $region36
      $region35: #{tpu_custom_call.1} parent=5 // pred_region
        %s248 = ssub.s32 %s18, 1
        %p249 = scmp.lt.s32.totalorder %s27, 1
        %s250 = scalar_select %p249, %s27, 1
        %p251 = scmp.lt.s32.totalorder %s28, 0
        %s252 = scalar_select %p251, %s28, 0
        %s253 = sadd.s32 %s252, %s250
        %s254 = scalar_lea.vmem %s0, %s253
        %p255 = pneg %p58
        %p256 = pneg %p55
        %p257 = scmp.lt.s32.totalorder %s27, 1
        %s258 = scalar_select %p257, %s27, 1
        %s259 = smul.addr %s258, 2
        %s260 = smul.addr %s259, 8
        %s261 = scalar_lea.vmem %s1, %s260
        %p262 = pneg %p84
        %p263 = pneg %p81
        %p264 = scmp.lt.s32.totalorder %s27, 1
        %s265 = scalar_select %p264, %s27, 1
        %s266 = smul.addr %s265, 2
        %s267 = smul.addr %s266, 8
        %s268 = scalar_lea.vmem %s2, %s267
        %p269 = pneg %p110
        %p270 = pneg %p107
        %p271 = scmp.lt.s32.totalorder %s27, 1
        %s272 = scalar_select %p271, %s27, 1
        %s273 = scalar_lea.vmem %s3, %s272
        %p274 = pneg %p136
        %p275 = pneg %p133
        %p276 = pneg %p164
        %p277 = pneg %p161
        %s278 = sand.u32 %s151, 1
        %s279 = scalar_lea.sflag [#allocation3], %s278
        %s280 = sand.u32 %s151, 1
        %s281 = scalar_lea.vmem [#allocation2], %s280
        %p282 = pneg %p192
        %p283 = pneg %p189
        %s284 = sand.u32 %s179, 1
        %s285 = scalar_lea.sflag [#allocation5], %s284
        %s286 = sand.u32 %s179, 1
        %s287 = scalar_lea.vmem [#allocation4], %s286
        %p288 = scmp.lt.s32.totalorder %s27, 1
        %s289 = scalar_select %p288, %s27, 1
        %p290 = scmp.lt.s32.totalorder %s28, 0
        %s291 = scalar_select %p290, %s28, 0
        %s292 = sadd.s32 %s291, %s289
        %s293 = scalar_lea.vmem %s0, %s292
        %p294 = scmp.lt.s32.totalorder %s27, 1
        %s295 = scalar_select %p294, %s27, 1
        %s296 = smul.addr %s295, 2
        %s297 = smul.addr %s296, 8
        %s298 = scalar_lea.vmem %s1, %s297
        %p299 = scmp.lt.s32.totalorder %s27, 1
        %s300 = scalar_select %p299, %s27, 1
        %s301 = smul.addr %s300, 2
        %s302 = smul.addr %s301, 8
        %s303 = scalar_lea.vmem %s2, %s302
        %p304 = scmp.lt.s32.totalorder %s27, 1
        %s305 = scalar_select %p304, %s27, 1
        %s306 = scalar_lea.vmem %s3, %s305
        %v307 = vld [vmem:[%s293] sm:$0x1]
        %v308 = vmul.f32 %v307, 0.70710677
        %v309 = vld [vmem:[%s298] sm:$0xff]
        %v310 = vld [vmem:[%s298 + $0x8] sm:$0x3]
        %v311 = vld [vmem:[%s303] sm:$0xff]
        %v312 = vld [vmem:[%s303 + $0x8] sm:$0x3]
        %vm313 = vcmask 15360
        %v315 = vsel %vm313, %v308, 0
        %v318 = vsel %vm313, %v309, 0
        %v321 = vsel %vm313, %v310, 0
        %323 = vmatprep.subr.mxu0 0.0
        %324 = vmatpush1.xpose.msra.mxu0 %v318
        %325 = vmatprep.subr.mxu0 0.0
        %326 = vmatpush1.xpose.msra.mxu0 %v321
        %327 = vmatprep.subr.mxu0 0.0
        %328 = vmatpush1.xpose.msra.mxu0 0.0
        %329 = vmatprep.subr.mxu0 0.0
        %330 = vmatpush1.xpose.msra.mxu0 0.0
        %331 = vmatprep.subr.mxu0 0.0
        %332 = vmatpush1.xpose.msra.mxu0 0.0
        %333 = vmatprep.subr.mxu0 0.0
        %334 = vmatpush1.xpose.msra.mxu0 0.0
        %335 = vmatprep.subr.mxu0 0.0
        %336 = vmatpush1.xpose.msra.mxu0 0.0
        %337 = vmatprep.subr.mxu0 0.0
        %338 = vmatpush1.xpose.msra.mxu0 0.0
        %339 = vmatprep.subr.mxu0 0.0
        %340 = vmatpush1.xpose.msra.mxu0 0.0
        %341 = vmatprep.subr.mxu0 0.0
        %342 = vmatpush1.xpose.msra.mxu0 0.0
        %343 = vmatprep.subr.mxu0 0.0
        %344 = vmatpush1.xpose.msra.mxu0 0.0
        %345 = vmatprep.subr.mxu0 0.0
        %346 = vmatpush1.xpose.msra.mxu0 0.0
        %347 = vmatprep.subr.mxu0 0.0
        %348 = vmatpush1.xpose.msra.mxu0 0.0
        %349 = vmatprep.subr.mxu0 0.0
        %350 = vmatpush1.xpose.msra.mxu0 0.0
        %351 = vmatprep.subr.mxu0 0.0
        %352 = vmatpush1.xpose.msra.mxu0 0.0
        %353 = vmatprep.subr.mxu0 0.0
        %354 = vmatpush1.xpose.msra.mxu0 0.0
        %355 = vmatprep.subr.mxu0 0.0
        %356 = vmatpush1.xpose.msra.mxu0 0.0
        %357 = vmatprep.subr.mxu0 0.0
        %358 = vmatpush1.xpose.msra.mxu0 0.0
        %359 = vmatprep.subr.mxu0 0.0
        %360 = vmatpush1.xpose.msra.mxu0 0.0
        %361 = vmatprep.subr.mxu0 0.0
        %362 = vmatpush1.xpose.msra.mxu0 0.0
        %363 = vmatprep.subr.mxu0 0.0
        %364 = vmatpush1.xpose.msra.mxu0 0.0
        %365 = vmatprep.subr.mxu0 0.0
        %366 = vmatpush1.xpose.msra.mxu0 0.0
        %367 = vmatprep.subr.mxu0 0.0
        %368 = vmatpush1.xpose.msra.mxu0 0.0
        %369 = vmatprep.subr.mxu0 0.0
        %370 = vmatpush1.xpose.msra.mxu0 0.0
        %371 = vmatprep.subr.mxu0 0.0
        %372 = vmatpush1.xpose.msra.mxu0 0.0
        %373 = vmatprep.subr.mxu0 0.0
        %374 = vmatpush1.xpose.msra.mxu0 0.0
        %375 = vmatprep.subr.mxu0 0.0
        %376 = vmatpush1.xpose.msra.mxu0 0.0
        %377 = vmatprep.subr.mxu0 0.0
        %378 = vmatpush1.xpose.msra.mxu0 0.0
        %379 = vmatprep.subr.mxu0 0.0
        %380 = vmatpush1.xpose.msra.mxu0 0.0
        %381 = vmatprep.subr.mxu0 0.0
        %382 = vmatpush1.xpose.msra.mxu0 0.0
        %383 = vmatprep.subr.mxu0 0.0
        %384 = vmatpush1.xpose.msra.mxu0 0.0
        %385 = vmatprep.subr.mxu0 0.0
        %386 = vmatpush1.xpose.msra.mxu0 0.0
        %387 = vmatprep.mubr.f32.mxu0 0.0
        %388 = vmatmul.mubr.f32.gmra.mrb[0].mxu0 %v315
        %v389 = vpop.f32.mrb[0].mxu0
        %v390 = vadd.f32 0.0, %v389
        %v391 = vpop.f32.mrb[0].mxu0
        %392 = vdwg.mxu0
        %v393 = vld [vmem:[%s306] sm:$0x1]
        %v394 = vlaneseq
        %v395 = vand.u32 %v394, 127
        %396 = vset.pattern.permute.xlu0 0
        %397 = vperm.xlu0 %396, %v393
        %v398 = vpop.permute.xlu0 %397
        %v399 = vlaneseq
        %v400 = vshrl.u32 %v399, 7
        %v401 = vsub.s32 0, %v400
        %v402 = vrot.slane %v398, %v401
        %vm403 = vcmp.lt.s32.totalorder %v395, %v402
        %v404 = vsel %vm403, %v390, -1000000.0
        %vm405 = vcmask 73728
        %v406 = vsel %vm405, %v404, -inf
        %407 = vmax.xlane.f32.xlu0 %v406
        %v408 = vpop.xlane.xlu0 %407
        %v409 = vsub.f32 %v404, %v408
        %v410 = vmul.f32 %v409, 1.442695
        %v411 = vpow.pop %v410
        %v412 = vsel %vm405, %v411, 0.0
        %413 = vadd.xlane.f32.xlu0 %v412
        %v414 = vpop.xlane.xlu0 %413
        %v415 = vrcp.pop %v414
        %v416 = vmul.f32 %v414, %v415
        %v417 = vsub.f32 2.0, %v416
        %v418 = vmul.f32 %v415, %v417
        %v419 = vmul.f32 %v411, %v418
        %420 = vst.msk [vmem:[%s287] sm:$0x1] %vm405, %v419
        %vm421 = vcmask 80896
        %v423 = vsel %vm421, %v419, 0
        %vm425 = vcmask 1041408
        %v427 = vsel %vm425, %v312, 0
        %429 = vmatprep.subr.mxu0 0.0
        %430 = vmatpush1.msra.mxu0 %v311
        %431 = vmatprep.subr.mxu0 0.0
        %432 = vmatpush1.msra.mxu0 %v427
        %433 = vmatprep.subr.mxu0 0.0
        %434 = vmatpush1.msra.mxu0 0.0
        %435 = vmatprep.subr.mxu0 0.0
        %436 = vmatpush1.msra.mxu0 0.0
        %437 = vmatprep.subr.mxu0 0.0
        %438 = vmatpush1.msra.mxu0 0.0
        %439 = vmatprep.subr.mxu0 0.0
        %440 = vmatpush1.msra.mxu0 0.0
        %441 = vmatprep.subr.mxu0 0.0
        %442 = vmatpush1.msra.mxu0 0.0
        %443 = vmatprep.subr.mxu0 0.0
        %444 = vmatpush1.msra.mxu0 0.0
        %445 = vmatprep.subr.mxu0 0.0
        %446 = vmatpush1.msra.mxu0 0.0
        %447 = vmatprep.subr.mxu0 0.0
        %448 = vmatpush1.msra.mxu0 0.0
        %449 = vmatprep.subr.mxu0 0.0
        %450 = vmatpush1.msra.mxu0 0.0
        %451 = vmatprep.subr.mxu0 0.0
        %452 = vmatpush1.msra.mxu0 0.0
        %453 = vmatprep.subr.mxu0 0.0
        %454 = vmatpush1.msra.mxu0 0.0
        %455 = vmatprep.subr.mxu0 0.0
        %456 = vmatpush1.msra.mxu0 0.0
        %457 = vmatprep.subr.mxu0 0.0
        %458 = vmatpush1.msra.mxu0 0.0
        %459 = vmatprep.subr.mxu0 0.0
        %460 = vmatpush1.msra.mxu0 0.0
        %461 = vmatprep.subr.mxu0 0.0
        %462 = vmatpush1.msra.mxu0 0.0
        %463 = vmatprep.subr.mxu0 0.0
        %464 = vmatpush1.msra.mxu0 0.0
        %465 = vmatprep.subr.mxu0 0.0
        %466 = vmatpush1.msra.mxu0 0.0
        %467 = vmatprep.subr.mxu0 0.0
        %468 = vmatpush1.msra.mxu0 0.0
        %469 = vmatprep.subr.mxu0 0.0
        %470 = vmatpush1.msra.mxu0 0.0
        %471 = vmatprep.subr.mxu0 0.0
        %472 = vmatpush1.msra.mxu0 0.0
        %473 = vmatprep.subr.mxu0 0.0
        %474 = vmatpush1.msra.mxu0 0.0
        %475 = vmatprep.subr.mxu0 0.0
        %476 = vmatpush1.msra.mxu0 0.0
        %477 = vmatprep.subr.mxu0 0.0
        %478 = vmatpush1.msra.mxu0 0.0
        %479 = vmatprep.subr.mxu0 0.0
        %480 = vmatpush1.msra.mxu0 0.0
        %481 = vmatprep.subr.mxu0 0.0
        %482 = vmatpush1.msra.mxu0 0.0
        %483 = vmatprep.subr.mxu0 0.0
        %484 = vmatpush1.msra.mxu0 0.0
        %485 = vmatprep.subr.mxu0 0.0
        %486 = vmatpush1.msra.mxu0 0.0
        %487 = vmatprep.subr.mxu0 0.0
        %488 = vmatpush1.msra.mxu0 0.0
        %489 = vmatprep.subr.mxu0 0.0
        %490 = vmatpush1.msra.mxu0 0.0
        %491 = vmatprep.subr.mxu0 0.0
        %492 = vmatpush1.msra.mxu0 0.0
        %493 = vmatprep.mubr.f32.mxu0 0.0
        %494 = vmatmul.mubr.f32.gmra.mrb[0].mxu0 %v423
        %v495 = vpop.f32.mrb[0].mxu0
        %v496 = vadd.f32 0.0, %v495
        %v497 = vpop.f32.mrb[0].mxu0
        %498 = vdwg.mxu0
        %vm499 = vcmask 24576
        %500 = vst.msk [vmem:[%s281] sm:$0x1] %vm499, %v496
        %s501 = sand.u32 %s151, 1
        %s502 = scalar_lea.sflag [#allocation3], %s501
        %s503 = sand.u32 %s151, 1
        %s504 = scalar_lea.vmem [#allocation2], %s503
        %s505 = sand.u32 %s179, 1
        %s506 = scalar_lea.sflag [#allocation5], %s505
        %s507 = sand.u32 %s179, 1
        %s508 = scalar_lea.vmem [#allocation4], %s507
        // Predicated region
        $region37: #{tpu_custom_call.1} parent=35 // pred_check
          %p509 = pneg %p161
        $region38: #{tpu_custom_call.1} parent=35 // pred_check_branch
          %511 = sbr.rel (%p509) target = $region40
        $region39: #{tpu_custom_call.1} parent=35 // pred_region
          %s513 = ssub.s32 16, 16
          %514 = vsyncadd %s502, %s513
          %s515 = sadd.s32 %s28, %s27
          %s516 = smul.addr %s515, 16
          %s517 = scalar_lea.hbm %s4, %s516
          %s519 = sshll.u32 %s504, 4
          %s520 = int_to_ptr.vmem [resolvable:$true] %s519
          %522 = dma.vmem_to_hbm [thread:$0]  %s520, 16, %s517, %s502
        $region40: #{tpu_custom_call.1} parent=35 // pred_fallthru
          _
        // Predicated region
        $region41: #{tpu_custom_call.1} parent=35 // pred_check
          %p523 = pneg %p189
        $region42: #{tpu_custom_call.1} parent=35 // pred_check_branch
          %525 = sbr.rel (%p523) target = $region44
        $region43: #{tpu_custom_call.1} parent=35 // pred_region
          %s527 = ssub.s32 16, 16
          %528 = vsyncadd %s506, %s527
          %s529 = sadd.s32 %s28, %s27
          %s530 = smul.addr %s529, 16
          %s531 = scalar_lea.hbm %s5, %s530
          %s533 = sshll.u32 %s508, 4
          %s534 = int_to_ptr.vmem [resolvable:$true] %s533
          %536 = dma.vmem_to_hbm [thread:$0]  %s534, 16, %s531, %s506
        $region44: #{tpu_custom_call.1} parent=35 // pred_fallthru
          _
      $region36: #{tpu_custom_call.1} parent=5 // pred_fallthru
        _
      %p537 = scmp.le.s32.totalorder 2, %s18
      // Predicated region
      $region45: #{tpu_custom_call.1} parent=5 // pred_check
        %p538 = pneg %p537
      $region46: #{tpu_custom_call.1} parent=5 // pred_check_branch
        %540 = sbr.rel (%p538) target = $region48
      $region47: #{tpu_custom_call.1} parent=5 // pred_region
        %s541 = ssub.s32 %s18, 2
        // Predicated region
        $region49: #{tpu_custom_call.1} parent=47 // pred_check
          %p542 = pneg %p167
        $region50: #{tpu_custom_call.1} parent=47 // pred_check_branch
          %544 = sbr.rel (%p542) target = $region52
        $region51: #{tpu_custom_call.1} parent=47 // pred_region
          %s545 = sand.u32 %s152, 1
          %s546 = scalar_lea.sflag [#allocation3], %s545
          %s547 = sand.u32 %s152, 1
          %s548 = scalar_lea.vmem [#allocation2], %s547
          %549 = dma.done %s546, 16
        $region52: #{tpu_custom_call.1} parent=47 // pred_fallthru
          _
        // Predicated region
        $region53: #{tpu_custom_call.1} parent=47 // pred_check
          %p550 = pneg %p195
        $region54: #{tpu_custom_call.1} parent=47 // pred_check_branch
          %552 = sbr.rel (%p550) target = $region56
        $region55: #{tpu_custom_call.1} parent=47 // pred_region
          %s553 = sand.u32 %s180, 1
          %s554 = scalar_lea.sflag [#allocation5], %s553
          %s555 = sand.u32 %s180, 1
          %s556 = scalar_lea.vmem [#allocation4], %s555
          %557 = dma.done %s554, 16
        $region56: #{tpu_custom_call.1} parent=47 // pred_fallthru
          _
      $region48: #{tpu_custom_call.1} parent=5 // pred_fallthru
        _
    $region6: #{tpu_custom_call.1} parent=1 // loop_footer
      %s22 = sadd.s32 1, %s18
    $region7: #{tpu_custom_call.1} parent=1 // loop_footer_branch
      %17 = sbr.rel target = $region3
    $region8: #{tpu_custom_call.1} parent=1 // loop_exit
      _
    %558 = vsyncpa [#allocation3], 1
    %s559 = scalar_lea.sflag [#allocation3], 1
    %560 = vsyncpa %s559, 1
    %561 = vsyncpa [#allocation5], 1
    %s562 = scalar_lea.sflag [#allocation5], 1
    %563 = vsyncpa %s562, 1

</llo_original>
